<compile_context>
chip_gen: v6e
topology: v6e:2x2x1
jax: 0.10.0
libtpu: 0.0.40
codegen_flags: <defaults>
</compile_context>

<pallas_src>
import jax
import jax.numpy as jnp
from jax.experimental import pallas as pl
from jax.experimental.pallas import tpu as pltpu


def _round_up(x, m):
    return pl.cdiv(x, m) * m


# --------------------------------------------------------------------------- #
# Kernel
# --------------------------------------------------------------------------- #
def _dqn_kernel(x_ref,
                wh1_ref, bh1_ref, wh2_ref, bh2_ref,
                w0x_ref, w0h_ref, b0_ref,
                w1_ref, b1_ref,
                w2_ref, b2_ref,
                w3_ref, b3_ref,
                out_ref):
    cdt = wh1_ref.dtype            # compute dtype (f32 or bf16); biases/accum are f32
    x = x_ref[...].astype(cdt)     # in-tile cast (cheap VPU work, hidden under DMA)

    # History MLP.  wh1 has zero rows for the non-history features, so
    # x @ wh1 == x[:, -H:] @ Wh1 exactly.
    h = jnp.dot(x, wh1_ref[...], preferred_element_type=jnp.float32) + bh1_ref[...]
    h = jnp.maximum(h, 0.0).astype(cdt)
    h = (jnp.dot(h, wh2_ref[...], preferred_element_type=jnp.float32)
         + bh2_ref[...]).astype(cdt)

    # fc layer 0 applied to concat([reg, hist_out]) via the split weight:
    # x @ w0x (history rows zeroed) + hist_out @ w0h == combined @ W0.
    z = (jnp.dot(x, w0x_ref[...], preferred_element_type=jnp.float32)
         + jnp.dot(h, w0h_ref[...], preferred_element_type=jnp.float32)
         + b0_ref[...])
    z = jnp.maximum(z, 0.0).astype(cdt)

    z = jnp.dot(z, w1_ref[...], preferred_element_type=jnp.float32) + b1_ref[...]
    z = jnp.maximum(z, 0.0).astype(cdt)
    z = jnp.dot(z, w2_ref[...], preferred_element_type=jnp.float32) + b2_ref[...]
    z = jnp.maximum(z, 0.0).astype(cdt)
    z = jnp.dot(z, w3_ref[...], preferred_element_type=jnp.float32) + b3_ref[...]

    out_ref[...] = z.astype(out_ref.dtype)   # exact-width (tb, num_actions) store


# --------------------------------------------------------------------------- #
# One-time parameter preprocessing (run when params change, NOT per call)
# --------------------------------------------------------------------------- #
def prepare_params(params, num_inputs, hist_hidden, compute_dtype=jnp.float32):
    """Folds the reg/hist split + concat into the weights and casts them once.

      * wh1 is expanded to (num_inputs, H) with zero rows for the regular
        (non-history) features, so it can be applied to the whole x.
      * w0 is split into w0x (num_inputs, h0) with its history rows zeroed
        (applied to x) and w0h (H, h0) (applied to the history-MLP output).
    Weights are cast to compute_dtype; biases stay f32 (accumulator dtype).
    """
    reg_dim = num_inputs - hist_hidden
    cdt = compute_dtype

    wh1_full = jnp.pad(params["wh1"], ((reg_dim, 0), (0, 0))).astype(cdt)
    w0 = params["w0"]
    w0x = w0.at[reg_dim:].set(0.0).astype(cdt)
    w0h = w0[reg_dim:].astype(cdt)

    f32 = jnp.float32
    return (
        wh1_full, params["bh1"].astype(f32),
        params["wh2"].astype(cdt), params["bh2"].astype(f32),
        w0x, w0h, params["b0"].astype(f32),
        params["w1"].astype(cdt), params["b1"].astype(f32),
        params["w2"].astype(cdt), params["b2"].astype(f32),
        params["w3"].astype(cdt), params["b3"].astype(f32),
    )


# --------------------------------------------------------------------------- #
# Batch-tile selection
# --------------------------------------------------------------------------- #
_VMEM_TILE_BUDGET = 20 * 1024 * 1024   # pipeline-buffer budget, safe for v7x (64 MiB/TC)
_MIN_GRID_STEPS = 4                    # keep v7x's 2 TCs fed for large batches


def _choose_batch_tile(B, num_inputs, num_actions, feat_widths, x_itemsize, block_b):
    # Rough per-row VMEM bytes: double-buffered x/out blocks + f32 activations
    # (x2 headroom for compiler temporaries).
    per_row = (2 * num_inputs * x_itemsize
               + 2 * num_actions * 4
               + 2 * 4 * (num_inputs + sum(feat_widths)))
    tb = min(block_b, (_VMEM_TILE_BUDGET // per_row) // 8 * 8)
    # v7x: >=2 grid steps are required for the "parallel" batch axis to shard
    # across its 2 TensorCores; aim for >=4 so each core's pipeline stays fed.
    if B >= _MIN_GRID_STEPS * 8:
        tb = min(tb, _round_up(pl.cdiv(B, _MIN_GRID_STEPS), 8))
    tb = min(tb, _round_up(B, 8))
    return max(8, int(tb))


# --------------------------------------------------------------------------- #
# Forward wrapper
# --------------------------------------------------------------------------- #
def dqn_forward(x, ops, *, block_b=8192):
    """x: (B, num_inputs). ops: output of prepare_params(). Returns (B, num_actions) f32."""
    B, num_inputs = x.shape
    num_actions = ops[11].shape[1]
    feat_widths = (ops[0].shape[1],    # hist hidden
                   ops[4].shape[1],    # hidden[0]
                   ops[7].shape[1],    # hidden[1]
                   ops[9].shape[1],    # hidden[2]
                   num_actions)
    tb = _choose_batch_tile(B, num_inputs, num_actions, feat_widths,
                            x.dtype.itemsize, block_b)
    grid = (pl.cdiv(B, tb),)           # ragged last block is masked by Pallas

    x_spec = pl.BlockSpec((tb, num_inputs), lambda i: (i, 0))
    # Weights/biases: constant block index -> DMA'd once, stay resident in VMEM.
    # They total <30 KiB, so default double-buffering costs nothing; we keep it
    # (instead of pipeline_mode=pl.Buffered(1)) for compile robustness.
    const_specs = [pl.BlockSpec(a.shape, lambda i: (0, 0)) for a in ops]
    out_spec = pl.BlockSpec((tb, num_actions), lambda i: (i, 0))

    return pl.pallas_call(
        _dqn_kernel,
        out_shape=jax.ShapeDtypeStruct((B, num_actions), jnp.float32),
        grid=grid,
        in_specs=[x_spec] + const_specs,
        out_specs=out_spec,
        compiler_params=pltpu.CompilerParams(
            # Batch steps shard across TensorCores on v7x.
            dimension_semantics=("parallel",),
            # Explicit limit: v5e's default scoped-VMEM is only 16 MiB; 32 MiB
            # covers the tile budget and leaves headroom on v7x (64 MiB/TC).
            vmem_limit_bytes=32 * 1024 * 1024,
        ),
    )(x, *ops)


# --------------------------------------------------------------------------- #
# Init + pure-JAX reference
# --------------------------------------------------------------------------- #
def init_params(key, num_inputs, num_actions, hidden, hist_hidden):
    """torch.nn.Linear-style init (uniform +/- 1/sqrt(fan_in)); weights (in, out)."""
    params = {}

    def linear(key, fan_in, fan_out):
        kw, kb = jax.random.split(key)
        bound = 1.0 / jnp.sqrt(fan_in)
        w = jax.random.uniform(kw, (fan_in, fan_out), jnp.float32, -bound, bound)
        b = jax.random.uniform(kb, (1, fan_out), jnp.float32, -bound, bound)
        return w, b

    keys = jax.random.split(key, 6)
    params["wh1"], params["bh1"] = linear(keys[0], hist_hidden, hist_hidden)
    params["wh2"], params["bh2"] = linear(keys[1], hist_hidden, hist_hidden)
    params["w0"], params["b0"] = linear(keys[2], num_inputs, hidden[0])
    params["w1"], params["b1"] = linear(keys[3], hidden[0], hidden[1])
    params["w2"], params["b2"] = linear(keys[4], hidden[1], hidden[2])
    params["w3"], params["b3"] = linear(keys[5], hidden[2], num_actions)
    return params


def dqn_forward_ref(x, params, hist_hidden):
    """Pure-JAX reference mirroring the PyTorch forward exactly."""
    reg = x[:, :-hist_hidden]
    hist = x[:, -hist_hidden:]
    h = jnp.maximum(hist @ params["wh1"] + params["bh1"], 0.0)
    h = h @ params["wh2"] + params["bh2"]
    z = jnp.concatenate([reg, h], axis=1)
    z = jnp.maximum(z @ params["w0"] + params["b0"], 0.0)
    z = jnp.maximum(z @ params["w1"] + params["b1"], 0.0)
    z = jnp.maximum(z @ params["w2"] + params["b2"], 0.0)
    return z @ params["w3"] + params["b3"]


# TODO(synk): sample_action / masked-argmax / max-value helpers are host-side
# numpy utilities around the forward; a fused in-kernel masked argmax (output
# (B,1) int32) would shrink the writeback further but is left out to keep the
# module's forward semantics (Q-values) intact.

if __name__ == "__main__":
    batch = 20               # non-multiple of 8: exercises the ragged (masked) last block
    num_inputs = 32          # total observation size (regular 24 + history 8)
    hist_hidden = 8          # hps['hist']['HIDDEN_SIZE']
    hidden = (32, 32, 32)    # hps hidden layer sizes
    num_actions = 10

    key = jax.random.PRNGKey(0)
    kx, kp = jax.random.split(key)
    x = jax.random.normal(kx, (batch, num_inputs), dtype=jnp.float32)
    params = init_params(kp, num_inputs, num_actions, hidden, hist_hidden)

    q_ref = dqn_forward_ref(x, params, hist_hidden)

    fwd = jax.jit(dqn_forward, static_argnames=("block_b",))

    # f32 path, default (large) batch tile -> single grid step at this size.
    ops_f32 = prepare_params(params, num_inputs, hist_hidden, jnp.float32)
    q = jax.block_until_ready(fwd(x, ops_f32, block_b=8192))
    assert q.shape == (batch, num_actions)
    assert jnp.allclose(q, q_ref, atol=1e-5, rtol=1e-5)

    # Small tile -> multi-step grid + ragged masked last block.
    q_small = jax.block_until_ready(fwd(x, ops_f32, block_b=8))
    assert jnp.allclose(q_small, q_ref, atol=1e-5, rtol=1e-5)

    # bf16 compute path (weights prepared once in bf16, f32 accumulation,
    # x cast in-kernel) — looser tolerance.
    ops_bf16 = prepare_params(params, num_inputs, hist_hidden, jnp.bfloat16)
    q_bf16 = jax.block_until_ready(fwd(x, ops_bf16, block_b=8192))
    assert q_bf16.shape == (batch, num_actions)
    assert jnp.allclose(q_bf16, q_ref, atol=1e-1, rtol=1e-1)

    print("KERNEL_OK")
</pallas_src>

<mosaic_0001>
module attributes {stable_mosaic.version = 11 : i64} {
  func.func @_dqn_kernel(%arg0: i32, %arg1: memref<24x32xf32, #tpu.memory_space<vmem>>, %arg2: memref<32x8xf32, #tpu.memory_space<vmem>>, %arg3: memref<1x8xf32, #tpu.memory_space<vmem>>, %arg4: memref<8x8xf32, #tpu.memory_space<vmem>>, %arg5: memref<1x8xf32, #tpu.memory_space<vmem>>, %arg6: memref<32x32xf32, #tpu.memory_space<vmem>>, %arg7: memref<8x32xf32, #tpu.memory_space<vmem>>, %arg8: memref<1x32xf32, #tpu.memory_space<vmem>>, %arg9: memref<32x32xf32, #tpu.memory_space<vmem>>, %arg10: memref<1x32xf32, #tpu.memory_space<vmem>>, %arg11: memref<32x32xf32, #tpu.memory_space<vmem>>, %arg12: memref<1x32xf32, #tpu.memory_space<vmem>>, %arg13: memref<32x10xf32, #tpu.memory_space<vmem>>, %arg14: memref<1x10xf32, #tpu.memory_space<vmem>>, %arg15: memref<24x10xf32, #tpu.memory_space<vmem>>) attributes {dimension_semantics = [#tpu.dimension_semantics<parallel>], iteration_bounds = array<i64: 1>, scalar_prefetch = 0 : i64, scratch_operands = 0 : i64, tpu.core_type = #tpu.core_type<tc>, window_params = [{transform_indices = @transform_0, window_bounds = array<i64: 24, 32>}, {pipeline_mode = #tpu.pipeline_mode<synchronous>, transform_indices = @transform_1, window_bounds = array<i64: 32, 8>}, {pipeline_mode = #tpu.pipeline_mode<synchronous>, transform_indices = @transform_2, window_bounds = array<i64: 1, 8>}, {pipeline_mode = #tpu.pipeline_mode<synchronous>, transform_indices = @transform_3, window_bounds = array<i64: 8, 8>}, {pipeline_mode = #tpu.pipeline_mode<synchronous>, transform_indices = @transform_4, window_bounds = array<i64: 1, 8>}, {pipeline_mode = #tpu.pipeline_mode<synchronous>, transform_indices = @transform_5, window_bounds = array<i64: 32, 32>}, {pipeline_mode = #tpu.pipeline_mode<synchronous>, transform_indices = @transform_6, window_bounds = array<i64: 8, 32>}, {pipeline_mode = #tpu.pipeline_mode<synchronous>, transform_indices = @transform_7, window_bounds = array<i64: 1, 32>}, {pipeline_mode = #tpu.pipeline_mode<synchronous>, transform_indices = @transform_8, window_bounds = array<i64: 32, 32>}, {pipeline_mode = #tpu.pipeline_mode<synchronous>, transform_indices = @transform_9, window_bounds = array<i64: 1, 32>}, {pipeline_mode = #tpu.pipeline_mode<synchronous>, transform_indices = @transform_10, window_bounds = array<i64: 32, 32>}, {pipeline_mode = #tpu.pipeline_mode<synchronous>, transform_indices = @transform_11, window_bounds = array<i64: 1, 32>}, {pipeline_mode = #tpu.pipeline_mode<synchronous>, transform_indices = @transform_12, window_bounds = array<i64: 32, 10>}, {pipeline_mode = #tpu.pipeline_mode<synchronous>, transform_indices = @transform_13, window_bounds = array<i64: 1, 10>}, {transform_indices = @transform_14, window_bounds = array<i64: 24, 10>}]} {
    %c0 = arith.constant 0 : index
    %c0_0 = arith.constant 0 : index
    %0 = vector.load %arg1[%c0, %c0_0] : memref<24x32xf32, #tpu.memory_space<vmem>>, vector<24x32xf32>
    %c0_1 = arith.constant 0 : index
    %c0_2 = arith.constant 0 : index
    %1 = vector.load %arg2[%c0_1, %c0_2] : memref<32x8xf32, #tpu.memory_space<vmem>>, vector<32x8xf32>
    %cst = arith.constant dense<0.000000e+00> : vector<24x8xf32>
    %2 = tpu.matmul %0, %1, %cst {dimension_numbers = #tpu.dot_dimension_numbers<[1], [0], [0], [1], [0, 0, 1, 1], [], []>} : vector<24x32xf32>, vector<32x8xf32>, vector<24x8xf32> -> vector<24x8xf32>
    %c0_3 = arith.constant 0 : index
    %c0_4 = arith.constant 0 : index
    %3 = vector.load %arg3[%c0_3, %c0_4] : memref<1x8xf32, #tpu.memory_space<vmem>>, vector<1x8xf32>
    %4 = vector.broadcast %3 : vector<1x8xf32> to vector<24x8xf32>
    %5 = arith.addf %2, %4 : vector<24x8xf32>
    %cst_5 = arith.constant 0.000000e+00 : f32
    %6 = vector.broadcast %cst_5 : f32 to vector<24x8xf32>
    %7 = arith.maximumf %5, %6 : vector<24x8xf32>
    %c0_6 = arith.constant 0 : index
    %c0_7 = arith.constant 0 : index
    %8 = vector.load %arg4[%c0_6, %c0_7] : memref<8x8xf32, #tpu.memory_space<vmem>>, vector<8x8xf32>
    %cst_8 = arith.constant dense<0.000000e+00> : vector<24x8xf32>
    %9 = tpu.matmul %7, %8, %cst_8 {dimension_numbers = #tpu.dot_dimension_numbers<[1], [0], [0], [1], [0, 0, 1, 1], [], []>} : vector<24x8xf32>, vector<8x8xf32>, vector<24x8xf32> -> vector<24x8xf32>
    %c0_9 = arith.constant 0 : index
    %c0_10 = arith.constant 0 : index
    %10 = vector.load %arg5[%c0_9, %c0_10] : memref<1x8xf32, #tpu.memory_space<vmem>>, vector<1x8xf32>
    %11 = vector.broadcast %10 : vector<1x8xf32> to vector<24x8xf32>
    %12 = arith.addf %9, %11 : vector<24x8xf32>
    %c0_11 = arith.constant 0 : index
    %c0_12 = arith.constant 0 : index
    %13 = vector.load %arg6[%c0_11, %c0_12] : memref<32x32xf32, #tpu.memory_space<vmem>>, vector<32x32xf32>
    %cst_13 = arith.constant dense<0.000000e+00> : vector<24x32xf32>
    %14 = tpu.matmul %0, %13, %cst_13 {dimension_numbers = #tpu.dot_dimension_numbers<[1], [0], [0], [1], [0, 0, 1, 1], [], []>} : vector<24x32xf32>, vector<32x32xf32>, vector<24x32xf32> -> vector<24x32xf32>
    %c0_14 = arith.constant 0 : index
    %c0_15 = arith.constant 0 : index
    %15 = vector.load %arg7[%c0_14, %c0_15] : memref<8x32xf32, #tpu.memory_space<vmem>>, vector<8x32xf32>
    %cst_16 = arith.constant dense<0.000000e+00> : vector<24x32xf32>
    %16 = tpu.matmul %12, %15, %cst_16 {dimension_numbers = #tpu.dot_dimension_numbers<[1], [0], [0], [1], [0, 0, 1, 1], [], []>} : vector<24x8xf32>, vector<8x32xf32>, vector<24x32xf32> -> vector<24x32xf32>
    %17 = arith.addf %14, %16 : vector<24x32xf32>
    %c0_17 = arith.constant 0 : index
    %c0_18 = arith.constant 0 : index
    %18 = vector.load %arg8[%c0_17, %c0_18] : memref<1x32xf32, #tpu.memory_space<vmem>>, vector<1x32xf32>
    %19 = vector.broadcast %18 : vector<1x32xf32> to vector<24x32xf32>
    %20 = arith.addf %17, %19 : vector<24x32xf32>
    %cst_19 = arith.constant 0.000000e+00 : f32
    %21 = vector.broadcast %cst_19 : f32 to vector<24x32xf32>
    %22 = arith.maximumf %20, %21 : vector<24x32xf32>
    %c0_20 = arith.constant 0 : index
    %c0_21 = arith.constant 0 : index
    %23 = vector.load %arg9[%c0_20, %c0_21] : memref<32x32xf32, #tpu.memory_space<vmem>>, vector<32x32xf32>
    %cst_22 = arith.constant dense<0.000000e+00> : vector<24x32xf32>
    %24 = tpu.matmul %22, %23, %cst_22 {dimension_numbers = #tpu.dot_dimension_numbers<[1], [0], [0], [1], [0, 0, 1, 1], [], []>} : vector<24x32xf32>, vector<32x32xf32>, vector<24x32xf32> -> vector<24x32xf32>
    %c0_23 = arith.constant 0 : index
    %c0_24 = arith.constant 0 : index
    %25 = vector.load %arg10[%c0_23, %c0_24] : memref<1x32xf32, #tpu.memory_space<vmem>>, vector<1x32xf32>
    %26 = vector.broadcast %25 : vector<1x32xf32> to vector<24x32xf32>
    %27 = arith.addf %24, %26 : vector<24x32xf32>
    %cst_25 = arith.constant 0.000000e+00 : f32
    %28 = vector.broadcast %cst_25 : f32 to vector<24x32xf32>
    %29 = arith.maximumf %27, %28 : vector<24x32xf32>
    %c0_26 = arith.constant 0 : index
    %c0_27 = arith.constant 0 : index
    %30 = vector.load %arg11[%c0_26, %c0_27] : memref<32x32xf32, #tpu.memory_space<vmem>>, vector<32x32xf32>
    %cst_28 = arith.constant dense<0.000000e+00> : vector<24x32xf32>
    %31 = tpu.matmul %29, %30, %cst_28 {dimension_numbers = #tpu.dot_dimension_numbers<[1], [0], [0], [1], [0, 0, 1, 1], [], []>} : vector<24x32xf32>, vector<32x32xf32>, vector<24x32xf32> -> vector<24x32xf32>
    %c0_29 = arith.constant 0 : index
    %c0_30 = arith.constant 0 : index
    %32 = vector.load %arg12[%c0_29, %c0_30] : memref<1x32xf32, #tpu.memory_space<vmem>>, vector<1x32xf32>
    %33 = vector.broadcast %32 : vector<1x32xf32> to vector<24x32xf32>
    %34 = arith.addf %31, %33 : vector<24x32xf32>
    %cst_31 = arith.constant 0.000000e+00 : f32
    %35 = vector.broadcast %cst_31 : f32 to vector<24x32xf32>
    %36 = arith.maximumf %34, %35 : vector<24x32xf32>
    %c0_32 = arith.constant 0 : index
    %c0_33 = arith.constant 0 : index
    %37 = vector.load %arg13[%c0_32, %c0_33] : memref<32x10xf32, #tpu.memory_space<vmem>>, vector<32x10xf32>
    %cst_34 = arith.constant dense<0.000000e+00> : vector<24x10xf32>
    %38 = tpu.matmul %36, %37, %cst_34 {dimension_numbers = #tpu.dot_dimension_numbers<[1], [0], [0], [1], [0, 0, 1, 1], [], []>} : vector<24x32xf32>, vector<32x10xf32>, vector<24x10xf32> -> vector<24x10xf32>
    %c0_35 = arith.constant 0 : index
    %c0_36 = arith.constant 0 : index
    %39 = vector.load %arg14[%c0_35, %c0_36] : memref<1x10xf32, #tpu.memory_space<vmem>>, vector<1x10xf32>
    %40 = vector.broadcast %39 : vector<1x10xf32> to vector<24x10xf32>
    %41 = arith.addf %38, %40 : vector<24x10xf32>
    %c0_37 = arith.constant 0 : index
    %c0_38 = arith.constant 0 : index
    %42 = vector.load %arg15[%c0_37, %c0_38] : memref<24x10xf32, #tpu.memory_space<vmem>>, vector<24x10xf32>
    tpu.vector_store %arg15[%c0_37, %c0_38], %41 {strides = array<i32>} : memref<24x10xf32, #tpu.memory_space<vmem>>, vector<24x10xf32>,
    return
  }
  func.func @transform_0(%arg0: i32) -> (i32, i32) {
    %c0_i32 = arith.constant 0 : i32
    %c0_i32_0 = arith.constant 0 : i32
    return %arg0, %c0_i32 : i32, i32
  }
  func.func @transform_1(%arg0: i32) -> (i32, i32) {
    %c0_i32 = arith.constant 0 : i32
    %c0_i32_0 = arith.constant 0 : i32
    %c0_i32_1 = arith.constant 0 : i32
    return %c0_i32, %c0_i32_0 : i32, i32
  }
  func.func @transform_2(%arg0: i32) -> (i32, i32) {
    %c0_i32 = arith.constant 0 : i32
    %c0_i32_0 = arith.constant 0 : i32
    %c0_i32_1 = arith.constant 0 : i32
    return %c0_i32, %c0_i32_0 : i32, i32
  }
  func.func @transform_3(%arg0: i32) -> (i32, i32) {
    %c0_i32 = arith.constant 0 : i32
    %c0_i32_0 = arith.constant 0 : i32
    %c0_i32_1 = arith.constant 0 : i32
    return %c0_i32, %c0_i32_0 : i32, i32
  }
  func.func @transform_4(%arg0: i32) -> (i32, i32) {
    %c0_i32 = arith.constant 0 : i32
    %c0_i32_0 = arith.constant 0 : i32
    %c0_i32_1 = arith.constant 0 : i32
    return %c0_i32, %c0_i32_0 : i32, i32
  }
  func.func @transform_5(%arg0: i32) -> (i32, i32) {
    %c0_i32 = arith.constant 0 : i32
    %c0_i32_0 = arith.constant 0 : i32
    %c0_i32_1 = arith.constant 0 : i32
    return %c0_i32, %c0_i32_0 : i32, i32
  }
  func.func @transform_6(%arg0: i32) -> (i32, i32) {
    %c0_i32 = arith.constant 0 : i32
    %c0_i32_0 = arith.constant 0 : i32
    %c0_i32_1 = arith.constant 0 : i32
    return %c0_i32, %c0_i32_0 : i32, i32
  }
  func.func @transform_7(%arg0: i32) -> (i32, i32) {
    %c0_i32 = arith.constant 0 : i32
    %c0_i32_0 = arith.constant 0 : i32
    %c0_i32_1 = arith.constant 0 : i32
    return %c0_i32, %c0_i32_0 : i32, i32
  }
  func.func @transform_8(%arg0: i32) -> (i32, i32) {
    %c0_i32 = arith.constant 0 : i32
    %c0_i32_0 = arith.constant 0 : i32
    %c0_i32_1 = arith.constant 0 : i32
    return %c0_i32, %c0_i32_0 : i32, i32
  }
  func.func @transform_9(%arg0: i32) -> (i32, i32) {
    %c0_i32 = arith.constant 0 : i32
    %c0_i32_0 = arith.constant 0 : i32
    %c0_i32_1 = arith.constant 0 : i32
    return %c0_i32, %c0_i32_0 : i32, i32
  }
  func.func @transform_10(%arg0: i32) -> (i32, i32) {
    %c0_i32 = arith.constant 0 : i32
    %c0_i32_0 = arith.constant 0 : i32
    %c0_i32_1 = arith.constant 0 : i32
    return %c0_i32, %c0_i32_0 : i32, i32
  }
  func.func @transform_11(%arg0: i32) -> (i32, i32) {
    %c0_i32 = arith.constant 0 : i32
    %c0_i32_0 = arith.constant 0 : i32
    %c0_i32_1 = arith.constant 0 : i32
    return %c0_i32, %c0_i32_0 : i32, i32
  }
  func.func @transform_12(%arg0: i32) -> (i32, i32) {
    %c0_i32 = arith.constant 0 : i32
    %c0_i32_0 = arith.constant 0 : i32
    %c0_i32_1 = arith.constant 0 : i32
    return %c0_i32, %c0_i32_0 : i32, i32
  }
  func.func @transform_13(%arg0: i32) -> (i32, i32) {
    %c0_i32 = arith.constant 0 : i32
    %c0_i32_0 = arith.constant 0 : i32
    %c0_i32_1 = arith.constant 0 : i32
    return %c0_i32, %c0_i32_0 : i32, i32
  }
  func.func @transform_14(%arg0: i32) -> (i32, i32) {
    %c0_i32 = arith.constant 0 : i32
    %c0_i32_0 = arith.constant 0 : i32
    return %arg0, %c0_i32 : i32, i32
  }
}

</mosaic_0001>

<llo_original>
// kernel: dqn_forward.1
$region0: #{dqn_forward.1}
  #allocation0 [shape = 'u32[]', space=smem, size = 0x4, offset = 0x4, fixed_abs, tag = 'smem constant byte address 0x4 - core index']
  #allocation1 [shape = 'u32[144,128]{1,0:T(1,128)}', space=vmem, size = 0x12000, scoped, tag = 'internal scratch']
  %s0 = inlined_call_operand.hbm [shape: f32[20,32], index: 0, kind: input, shape index: {}]
  %s1 = inlined_call_operand.vmem [shape: f32[32,8], index: 1, kind: input, shape index: {}]
  %s2 = inlined_call_operand.vmem [shape: f32[1,8], index: 2, kind: input, shape index: {}]
  %s3 = inlined_call_operand.hbm [shape: f32[8,8], index: 3, kind: input, shape index: {}]
  %s4 = inlined_call_operand.hbm [shape: f32[1,8], index: 4, kind: input, shape index: {}]
  %s5 = inlined_call_operand.vmem [shape: f32[32,32], index: 5, kind: input, shape index: {}]
  %s6 = inlined_call_operand.hbm [shape: f32[8,32], index: 6, kind: input, shape index: {}]
  %s7 = inlined_call_operand.vmem [shape: f32[1,32], index: 7, kind: input, shape index: {}]
  %s8 = inlined_call_operand.vmem [shape: f32[32,32], index: 8, kind: input, shape index: {}]
  %s9 = inlined_call_operand.vmem [shape: f32[1,32], index: 9, kind: input, shape index: {}]
  %s10 = inlined_call_operand.vmem [shape: f32[32,32], index: 10, kind: input, shape index: {}]
  %s11 = inlined_call_operand.vmem [shape: f32[1,32], index: 11, kind: input, shape index: {}]
  %s12 = inlined_call_operand.vmem [shape: f32[32,10], index: 12, kind: input, shape index: {}]
  %s13 = inlined_call_operand.vmem [shape: f32[1,10], index: 13, kind: input, shape index: {}]
  %s14 = inlined_call_operand.vmem [shape: f32[20,10], index: 14, kind: output, shape index: {}]
  %s15 = sld [smem:[#allocation0]]
  $region82: #{dqn_forward.1} parent=0
    _
  %s17 = ssub.s32 1, %s15
  %s18 = scalar_select 0, %s17, %s15
  $region1: #{dqn_forward.1} parent=0
    #allocation2 [shape = 'u8[12288]{0}', space=vmem, size = 0x3000, scoped, tag = 'input window, operand 0, single buffered']
    #allocation3 [shape = 's32[1]{0}', space=sflag, size = 0x4, scoped, tag = 'scoped memory for dqn_forward.1']
    #allocation4 [shape = 'u8[4096]{0}', space=vmem, size = 0x1000, scoped, tag = 'input window, operand 3, single buffered']
    #allocation5 [shape = 's32[1]{0}', space=sflag, size = 0x4, scoped, tag = 'scoped memory for dqn_forward.1']
    #allocation6 [shape = 'u8[512]{0}', space=vmem, size = 0x400, scoped, tag = 'input window, operand 4, single buffered']
    #allocation7 [shape = 'u8[4096]{0}', space=vmem, size = 0x1000, scoped, tag = 'input window, operand 6, single buffered']
    #allocation8 [shape = 's32[1]{0}', space=sflag, size = 0x4, scoped, tag = 'scoped memory for dqn_forward.1']
    %19 = vsyncpa [#allocation3], 0
    %20 = vsyncpa [#allocation5], 0
    %21 = vsyncpa [#allocation8], 0
    // Predicated region
    $region2: #{dqn_forward.1} parent=1 // pred_check
      _
    $region3: #{dqn_forward.1} parent=1 // pred_check_branch
      %23 = sbr.rel (0) target = $region5
    $region4: #{dqn_forward.1} parent=1 // pred_region
      %s25 = ssub.s32 384, 384
      %26 = vsyncadd [#allocation3], %s25
      %s27 = sshll.u32 [#allocation2], 4
      %s28 = int_to_ptr.vmem [resolvable:$true] %s27
      %33 = dma.hbm_to_vmem [thread:$0]  %s0, 384, %s28, [#allocation3], 128, 128, 8
    $region5: #{dqn_forward.1} parent=1 // pred_fallthru
      _
    // Predicated region
    $region6: #{dqn_forward.1} parent=1 // pred_check
      _
    $region7: #{dqn_forward.1} parent=1 // pred_check_branch
      %35 = sbr.rel (0) target = $region9
    $region8: #{dqn_forward.1} parent=1 // pred_region
      _
    $region9: #{dqn_forward.1} parent=1 // pred_fallthru
      _
    // Predicated region
    $region10: #{dqn_forward.1} parent=1 // pred_check
      _
    $region11: #{dqn_forward.1} parent=1 // pred_check_branch
      %37 = sbr.rel (0) target = $region13
    $region12: #{dqn_forward.1} parent=1 // pred_region
      _
    $region13: #{dqn_forward.1} parent=1 // pred_fallthru
      _
    // Predicated region
    $region14: #{dqn_forward.1} parent=1 // pred_check
      _
    $region15: #{dqn_forward.1} parent=1 // pred_check_branch
      %39 = sbr.rel (0) target = $region17
    $region16: #{dqn_forward.1} parent=1 // pred_region
      %s41 = ssub.s32 128, 128
      %42 = vsyncadd [#allocation5], %s41
      %s44 = sshll.u32 [#allocation4], 4
      %s45 = int_to_ptr.vmem [resolvable:$true] %s44
      %47 = dma.hbm_to_vmem [thread:$0]  %s3, 128, %s45, [#allocation5]
    $region17: #{dqn_forward.1} parent=1 // pred_fallthru
      _
    // Predicated region
    $region18: #{dqn_forward.1} parent=1 // pred_check
      _
    $region19: #{dqn_forward.1} parent=1 // pred_check_branch
      %49 = sbr.rel (0) target = $region21
    $region20: #{dqn_forward.1} parent=1 // pred_region
      %s51 = ssub.s32 16, 16
      %52 = vsyncadd [#allocation5], %s51
      %s54 = sshll.u32 [#allocation6], 4
      %s55 = int_to_ptr.vmem [resolvable:$true] %s54
      %57 = dma.hbm_to_vmem [thread:$0]  %s4, 16, %s55, [#allocation5]
    $region21: #{dqn_forward.1} parent=1 // pred_fallthru
      _
    // Predicated region
    $region22: #{dqn_forward.1} parent=1 // pred_check
      _
    $region23: #{dqn_forward.1} parent=1 // pred_check_branch
      %59 = sbr.rel (0) target = $region25
    $region24: #{dqn_forward.1} parent=1 // pred_region
      _
    $region25: #{dqn_forward.1} parent=1 // pred_fallthru
      _
    // Predicated region
    $region26: #{dqn_forward.1} parent=1 // pred_check
      _
    $region27: #{dqn_forward.1} parent=1 // pred_check_branch
      %61 = sbr.rel (0) target = $region29
    $region28: #{dqn_forward.1} parent=1 // pred_region
      %s63 = ssub.s32 128, 128
      %64 = vsyncadd [#allocation8], %s63
      %s66 = sshll.u32 [#allocation7], 4
      %s67 = int_to_ptr.vmem [resolvable:$true] %s66
      %69 = dma.hbm_to_vmem [thread:$0]  %s6, 128, %s67, [#allocation8]
    $region29: #{dqn_forward.1} parent=1 // pred_fallthru
      _
    // Predicated region
    $region30: #{dqn_forward.1} parent=1 // pred_check
      _
    $region31: #{dqn_forward.1} parent=1 // pred_check_branch
      %71 = sbr.rel (0) target = $region33
    $region32: #{dqn_forward.1} parent=1 // pred_region
      _
    $region33: #{dqn_forward.1} parent=1 // pred_fallthru
      _
    // Predicated region
    $region34: #{dqn_forward.1} parent=1 // pred_check
      _
    $region35: #{dqn_forward.1} parent=1 // pred_check_branch
      %73 = sbr.rel (0) target = $region37
    $region36: #{dqn_forward.1} parent=1 // pred_region
      _
    $region37: #{dqn_forward.1} parent=1 // pred_fallthru
      _
    // Predicated region
    $region38: #{dqn_forward.1} parent=1 // pred_check
      _
    $region39: #{dqn_forward.1} parent=1 // pred_check_branch
      %75 = sbr.rel (0) target = $region41
    $region40: #{dqn_forward.1} parent=1 // pred_region
      _
    $region41: #{dqn_forward.1} parent=1 // pred_fallthru
      _
    // Predicated region
    $region42: #{dqn_forward.1} parent=1 // pred_check
      _
    $region43: #{dqn_forward.1} parent=1 // pred_check_branch
      %77 = sbr.rel (0) target = $region45
    $region44: #{dqn_forward.1} parent=1 // pred_region
      _
    $region45: #{dqn_forward.1} parent=1 // pred_fallthru
      _
    // Predicated region
    $region46: #{dqn_forward.1} parent=1 // pred_check
      _
    $region47: #{dqn_forward.1} parent=1 // pred_check_branch
      %79 = sbr.rel (0) target = $region49
    $region48: #{dqn_forward.1} parent=1 // pred_region
      _
    $region49: #{dqn_forward.1} parent=1 // pred_fallthru
      _
    // Predicated region
    $region50: #{dqn_forward.1} parent=1 // pred_check
      _
    $region51: #{dqn_forward.1} parent=1 // pred_check_branch
      %81 = sbr.rel (0) target = $region53
    $region52: #{dqn_forward.1} parent=1 // pred_region
      _
    $region53: #{dqn_forward.1} parent=1 // pred_fallthru
      _
    // Predicated region
    $region54: #{dqn_forward.1} parent=1 // pred_check
      _
    $region55: #{dqn_forward.1} parent=1 // pred_check_branch
      %83 = sbr.rel (0) target = $region57
    $region56: #{dqn_forward.1} parent=1 // pred_region
      _
    $region57: #{dqn_forward.1} parent=1 // pred_fallthru
      _
    // Predicated region
    $region58: #{dqn_forward.1} parent=1 // pred_check
      _
    $region59: #{dqn_forward.1} parent=1 // pred_check_branch
      %85 = sbr.rel (0) target = $region61
    $region60: #{dqn_forward.1} parent=1 // pred_region
      %86 = dma.done [#allocation3], 384
    $region61: #{dqn_forward.1} parent=1 // pred_fallthru
      _
    // Predicated region
    $region62: #{dqn_forward.1} parent=1 // pred_check
      _
    $region63: #{dqn_forward.1} parent=1 // pred_check_branch
      %88 = sbr.rel (0) target = $region65
    $region64: #{dqn_forward.1} parent=1 // pred_region
      %89 = dma.done [#allocation5], 128
    $region65: #{dqn_forward.1} parent=1 // pred_fallthru
      _
    // Predicated region
    $region66: #{dqn_forward.1} parent=1 // pred_check
      _
    $region67: #{dqn_forward.1} parent=1 // pred_check_branch
      %91 = sbr.rel (0) target = $region69
    $region68: #{dqn_forward.1} parent=1 // pred_region
      %92 = dma.done [#allocation5], 16
    $region69: #{dqn_forward.1} parent=1 // pred_fallthru
      _
    // Predicated region
    $region70: #{dqn_forward.1} parent=1 // pred_check
      _
    $region71: #{dqn_forward.1} parent=1 // pred_check_branch
      %94 = sbr.rel (0) target = $region73
    $region72: #{dqn_forward.1} parent=1 // pred_region
      %95 = dma.done [#allocation8], 128
    $region73: #{dqn_forward.1} parent=1 // pred_fallthru
      _
    %v96 = vld [vmem:[#allocation2] sm:$0xff]
    %v97 = vld [vmem:[#allocation2 + $0x8] sm:$0xff]
    %v98 = vld [vmem:[#allocation2 + $0x10] sm:$0xff]
    %v99 = vld [vmem:[%s1] sm:$0xff]
    %v100 = vld [vmem:[%s1 + $0x8] sm:$0xff]
    %v101 = vld [vmem:[%s1 + $0x10] sm:$0xff]
    %v102 = vld [vmem:[%s1 + $0x18] sm:$0xff]
    %v103 = vld [vmem:[%s2] sm:$0x1]
    %v105 = vlaneseq
    %v106 = vshrl.u32 %v105, 7
    %v107 = vsub.s32 0, %v106
    %v108 = vrot.slane %v103, %v107
    %vm110 = vcmask 261120
    %v112 = vsel %vm110, %v96, 0
    %v115 = vsel %vm110, %v97, 0
    %v118 = vsel %vm110, %v98, 0
    %120 = vmatprep.subr.mxu0 0.0
    %121 = vmatpush1.msra.mxu0 0.0
    %122 = vmatprep.subr.mxu0 0.0
    %123 = vmatpush1.msra.mxu0 0.0
    %124 = vmatprep.subr.mxu0 0.0
    %125 = vmatpush1.msra.mxu0 0.0
    %126 = vmatprep.subr.mxu0 0.0
    %127 = vmatpush1.msra.mxu0 0.0
    %128 = vmatprep.subr.mxu0 0.0
    %129 = vmatpush1.msra.mxu0 0.0
    %130 = vmatprep.subr.mxu0 0.0
    %131 = vmatpush1.msra.mxu0 0.0
    %132 = vmatprep.subr.mxu0 0.0
    %133 = vmatpush1.msra.mxu0 0.0
    %134 = vmatprep.subr.mxu0 0.0
    %135 = vmatpush1.msra.mxu0 0.0
    %136 = vmatprep.subr.mxu0 0.0
    %137 = vmatpush1.msra.mxu0 0.0
    %138 = vmatprep.subr.mxu0 0.0
    %139 = vmatpush1.msra.mxu0 0.0
    %140 = vmatprep.subr.mxu0 0.0
    %141 = vmatpush1.msra.mxu0 0.0
    %142 = vmatprep.subr.mxu0 0.0
    %143 = vmatpush1.msra.mxu0 0.0
    %144 = vmatprep.subr.mxu0 0.0
    %145 = vmatpush1.msra.mxu0 %v102
    %146 = vmatprep.subr.mxu0 0.0
    %147 = vmatpush1.msra.mxu0 %v101
    %148 = vmatprep.subr.mxu0 0.0
    %149 = vmatpush1.msra.mxu0 %v100
    %150 = vmatprep.subr.mxu0 0.0
    %151 = vmatpush1.msra.mxu0 %v99
    %152 = vmatprep.subr.mxu0 0.0
    %153 = vmatpush2.msra.mxu0 0.0
    %154 = vmatprep.subr.mxu0 0.0
    %155 = vmatpush2.msra.mxu0 0.0
    %156 = vmatprep.subr.mxu0 0.0
    %157 = vmatpush2.msra.mxu0 0.0
    %158 = vmatprep.subr.mxu0 0.0
    %159 = vmatpush2.msra.mxu0 0.0
    %160 = vmatprep.subr.mxu0 0.0
    %161 = vmatpush2.msra.mxu0 0.0
    %162 = vmatprep.subr.mxu0 0.0
    %163 = vmatpush2.msra.mxu0 0.0
    %164 = vmatprep.subr.mxu0 0.0
    %165 = vmatpush2.msra.mxu0 0.0
    %166 = vmatprep.subr.mxu0 0.0
    %167 = vmatpush2.msra.mxu0 0.0
    %168 = vmatprep.subr.mxu0 0.0
    %169 = vmatpush2.msra.mxu0 0.0
    %170 = vmatprep.subr.mxu0 0.0
    %171 = vmatpush2.msra.mxu0 0.0
    %172 = vmatprep.subr.mxu0 0.0
    %173 = vmatpush2.msra.mxu0 0.0
    %174 = vmatprep.subr.mxu0 0.0
    %175 = vmatpush2.msra.mxu0 0.0
    %176 = vmatprep.subr.mxu0 0.0
    %177 = vmatpush2.msra.mxu0 0.0
    %178 = vmatprep.subr.mxu0 0.0
    %179 = vmatpush2.msra.mxu0 0.0
    %180 = vmatprep.subr.mxu0 0.0
    %181 = vmatpush2.msra.mxu0 0.0
    %182 = vmatprep.subr.mxu0 0.0
    %183 = vmatpush2.msra.mxu0 0.0
    %184 = vmatprep.mubr.f32.mxu0 0.0
    %185 = vmatmul.mubr.f32.gmra.mxu0 %v112
    %v186 = vpop.f32.mrf.mxu0
    %v187 = vadd.f32 %v108, %v186
    %v188 = vpop.f32.mrf.mxu0
    %189 = vmatprep.mubr.f32.mxu0 0.0
    %190 = vmatmul.mubr.f32.gmra.mxu0 %v115
    %v191 = vpop.f32.mrf.mxu0
    %v192 = vadd.f32 %v108, %v191
    %v193 = vpop.f32.mrf.mxu0
    %194 = vmatprep.mubr.f32.mxu0 0.0
    %195 = vmatmul.mubr.f32.gmra.mxu0 %v118
    %v196 = vpop.f32.mrf.mxu0
    %v197 = vadd.f32 %v108, %v196
    %v198 = vpop.f32.mrf.mxu0
    %199 = vdwg.mxu0
    %v200 = vmax.f32 %v187, 0.0
    %v201 = vmax.f32 %v192, 0.0
    %v202 = vmax.f32 %v197, 0.0
    %v203 = vld [vmem:[#allocation4] sm:$0xff]
    %v204 = vld [vmem:[#allocation6] sm:$0x1]
    %v206 = vlaneseq
    %v207 = vshrl.u32 %v206, 7
    %v208 = vsub.s32 0, %v207
    %v209 = vrot.slane %v204, %v208
    %vm211 = vcmask 64512
    %v213 = vsel %vm211, %v200, 0
    %v216 = vsel %vm211, %v201, 0
    %v219 = vsel %vm211, %v202, 0
    %221 = vmatprep.subr.mxu0 0.0
    %222 = vmatpush1.msra.mxu0 0.0
    %223 = vmatprep.subr.mxu0 0.0
    %224 = vmatpush1.msra.mxu0 0.0
    %225 = vmatprep.subr.mxu0 0.0
    %226 = vmatpush1.msra.mxu0 0.0
    %227 = vmatprep.subr.mxu0 0.0
    %228 = vmatpush1.msra.mxu0 0.0
    %229 = vmatprep.subr.mxu0 0.0
    %230 = vmatpush1.msra.mxu0 0.0
    %231 = vmatprep.subr.mxu0 0.0
    %232 = vmatpush1.msra.mxu0 0.0
    %233 = vmatprep.subr.mxu0 0.0
    %234 = vmatpush1.msra.mxu0 0.0
    %235 = vmatprep.subr.mxu0 0.0
    %236 = vmatpush1.msra.mxu0 0.0
    %237 = vmatprep.subr.mxu0 0.0
    %238 = vmatpush1.msra.mxu0 0.0
    %239 = vmatprep.subr.mxu0 0.0
    %240 = vmatpush1.msra.mxu0 0.0
    %241 = vmatprep.subr.mxu0 0.0
    %242 = vmatpush1.msra.mxu0 0.0
    %243 = vmatprep.subr.mxu0 0.0
    %244 = vmatpush1.msra.mxu0 0.0
    %245 = vmatprep.subr.mxu0 0.0
    %246 = vmatpush1.msra.mxu0 0.0
    %247 = vmatprep.subr.mxu0 0.0
    %248 = vmatpush1.msra.mxu0 0.0
    %249 = vmatprep.subr.mxu0 0.0
    %250 = vmatpush1.msra.mxu0 0.0
    %251 = vmatprep.subr.mxu0 0.0
    %252 = vmatpush1.msra.mxu0 %v203
    %253 = vmatprep.subr.mxu0 0.0
    %254 = vmatpush2.msra.mxu0 0.0
    %255 = vmatprep.subr.mxu0 0.0
    %256 = vmatpush2.msra.mxu0 0.0
    %257 = vmatprep.subr.mxu0 0.0
    %258 = vmatpush2.msra.mxu0 0.0
    %259 = vmatprep.subr.mxu0 0.0
    %260 = vmatpush2.msra.mxu0 0.0
    %261 = vmatprep.subr.mxu0 0.0
    %262 = vmatpush2.msra.mxu0 0.0
    %263 = vmatprep.subr.mxu0 0.0
    %264 = vmatpush2.msra.mxu0 0.0
    %265 = vmatprep.subr.mxu0 0.0
    %266 = vmatpush2.msra.mxu0 0.0
    %267 = vmatprep.subr.mxu0 0.0
    %268 = vmatpush2.msra.mxu0 0.0
    %269 = vmatprep.subr.mxu0 0.0
    %270 = vmatpush2.msra.mxu0 0.0
    %271 = vmatprep.subr.mxu0 0.0
    %272 = vmatpush2.msra.mxu0 0.0
    %273 = vmatprep.subr.mxu0 0.0
    %274 = vmatpush2.msra.mxu0 0.0
    %275 = vmatprep.subr.mxu0 0.0
    %276 = vmatpush2.msra.mxu0 0.0
    %277 = vmatprep.subr.mxu0 0.0
    %278 = vmatpush2.msra.mxu0 0.0
    %279 = vmatprep.subr.mxu0 0.0
    %280 = vmatpush2.msra.mxu0 0.0
    %281 = vmatprep.subr.mxu0 0.0
    %282 = vmatpush2.msra.mxu0 0.0
    %283 = vmatprep.subr.mxu0 0.0
    %284 = vmatpush2.msra.mxu0 0.0
    %285 = vmatprep.mubr.f32.mxu0 0.0
    %286 = vmatmul.mubr.f32.gmra.mxu0 %v213
    %v287 = vpop.f32.mrf.mxu0
    %v288 = vadd.f32 %v209, %v287
    %v289 = vpop.f32.mrf.mxu0
    %290 = vmatprep.mubr.f32.mxu0 0.0
    %291 = vmatmul.mubr.f32.gmra.mxu0 %v216
    %v292 = vpop.f32.mrf.mxu0
    %v293 = vadd.f32 %v209, %v292
    %v294 = vpop.f32.mrf.mxu0
    %295 = vmatprep.mubr.f32.mxu0 0.0
    %296 = vmatmul.mubr.f32.gmra.mxu0 %v219
    %v297 = vpop.f32.mrf.mxu0
    %v298 = vadd.f32 %v209, %v297
    %v299 = vpop.f32.mrf.mxu0
    %300 = vdwg.mxu0
    %v301 = vld [vmem:[%s5] sm:$0xff]
    %v302 = vld [vmem:[%s5 + $0x8] sm:$0xff]
    %v303 = vld [vmem:[%s5 + $0x10] sm:$0xff]
    %v304 = vld [vmem:[%s5 + $0x18] sm:$0xff]
    %v305 = vld [vmem:[#allocation7] sm:$0xff]
    %v307 = vsel %vm211, %v288, 0
    %v310 = vsel %vm211, %v293, 0
    %v313 = vsel %vm211, %v298, 0
    %315 = vmatprep.subr.mxu0 0.0
    %316 = vmatpush1.msra.mxu0 0.0
    %317 = vmatprep.subr.mxu0 0.0
    %318 = vmatpush1.msra.mxu0 0.0
    %319 = vmatprep.subr.mxu0 0.0
    %320 = vmatpush1.msra.mxu0 0.0
    %321 = vmatprep.subr.mxu0 0.0
    %322 = vmatpush1.msra.mxu0 0.0
    %323 = vmatprep.subr.mxu0 0.0
    %324 = vmatpush1.msra.mxu0 0.0
    %325 = vmatprep.subr.mxu0 0.0
    %326 = vmatpush1.msra.mxu0 0.0
    %327 = vmatprep.subr.mxu0 0.0
    %328 = vmatpush1.msra.mxu0 0.0
    %329 = vmatprep.subr.mxu0 0.0
    %330 = vmatpush1.msra.mxu0 0.0
    %331 = vmatprep.subr.mxu0 0.0
    %332 = vmatpush1.msra.mxu0 0.0
    %333 = vmatprep.subr.mxu0 0.0
    %334 = vmatpush1.msra.mxu0 0.0
    %335 = vmatprep.subr.mxu0 0.0
    %336 = vmatpush1.msra.mxu0 0.0
    %337 = vmatprep.subr.mxu0 0.0
    %338 = vmatpush1.msra.mxu0 0.0
    %339 = vmatprep.subr.mxu0 0.0
    %340 = vmatpush1.msra.mxu0 0.0
    %341 = vmatprep.subr.mxu0 0.0
    %342 = vmatpush1.msra.mxu0 0.0
    %343 = vmatprep.subr.mxu0 0.0
    %344 = vmatpush1.msra.mxu0 0.0
    %345 = vmatprep.subr.mxu0 0.0
    %346 = vmatpush1.msra.mxu0 %v305
    %347 = vmatprep.subr.mxu0 0.0
    %348 = vmatpush2.msra.mxu0 0.0
    %349 = vmatprep.subr.mxu0 0.0
    %350 = vmatpush2.msra.mxu0 0.0
    %351 = vmatprep.subr.mxu0 0.0
    %352 = vmatpush2.msra.mxu0 0.0
    %353 = vmatprep.subr.mxu0 0.0
    %354 = vmatpush2.msra.mxu0 0.0
    %355 = vmatprep.subr.mxu0 0.0
    %356 = vmatpush2.msra.mxu0 0.0
    %357 = vmatprep.subr.mxu0 0.0
    %358 = vmatpush2.msra.mxu0 0.0
    %359 = vmatprep.subr.mxu0 0.0
    %360 = vmatpush2.msra.mxu0 0.0
    %361 = vmatprep.subr.mxu0 0.0
    %362 = vmatpush2.msra.mxu0 0.0
    %363 = vmatprep.subr.mxu0 0.0
    %364 = vmatpush2.msra.mxu0 0.0
    %365 = vmatprep.subr.mxu0 0.0
    %366 = vmatpush2.msra.mxu0 0.0
    %367 = vmatprep.subr.mxu0 0.0
    %368 = vmatpush2.msra.mxu0 0.0
    %369 = vmatprep.subr.mxu0 0.0
    %370 = vmatpush2.msra.mxu0 0.0
    %371 = vmatprep.subr.mxu0 0.0
    %372 = vmatpush2.msra.mxu0 0.0
    %373 = vmatprep.subr.mxu0 0.0
    %374 = vmatpush2.msra.mxu0 0.0
    %375 = vmatprep.subr.mxu0 0.0
    %376 = vmatpush2.msra.mxu0 0.0
    %377 = vmatprep.subr.mxu0 0.0
    %378 = vmatpush2.msra.mxu0 0.0
    %379 = vmatprep.mubr.f32.mxu0 0.0
    %380 = vmatmul.mubr.f32.gmra.mxu0 %v307
    %v381 = vpop.f32.mrf.mxu0
    %v382 = vadd.f32 0.0, %v381
    %v383 = vpop.f32.mrf.mxu0
    %384 = vmatprep.mubr.f32.mxu0 0.0
    %385 = vmatmul.mubr.f32.gmra.mxu0 %v310
    %v386 = vpop.f32.mrf.mxu0
    %v387 = vadd.f32 0.0, %v386
    %v388 = vpop.f32.mrf.mxu0
    %389 = vmatprep.mubr.f32.mxu0 0.0
    %390 = vmatmul.mubr.f32.gmra.mxu0 %v313
    %v391 = vpop.f32.mrf.mxu0
    %v392 = vadd.f32 0.0, %v391
    %v393 = vpop.f32.mrf.mxu0
    %394 = vdwg.mxu0
    %395 = vmatprep.subr.mxu0 0.0
    %396 = vmatpush1.msra.mxu0 0.0
    %397 = vmatprep.subr.mxu0 0.0
    %398 = vmatpush1.msra.mxu0 0.0
    %399 = vmatprep.subr.mxu0 0.0
    %400 = vmatpush1.msra.mxu0 0.0
    %401 = vmatprep.subr.mxu0 0.0
    %402 = vmatpush1.msra.mxu0 0.0
    %403 = vmatprep.subr.mxu0 0.0
    %404 = vmatpush1.msra.mxu0 0.0
    %405 = vmatprep.subr.mxu0 0.0
    %406 = vmatpush1.msra.mxu0 0.0
    %407 = vmatprep.subr.mxu0 0.0
    %408 = vmatpush1.msra.mxu0 0.0
    %409 = vmatprep.subr.mxu0 0.0
    %410 = vmatpush1.msra.mxu0 0.0
    %411 = vmatprep.subr.mxu0 0.0
    %412 = vmatpush1.msra.mxu0 0.0
    %413 = vmatprep.subr.mxu0 0.0
    %414 = vmatpush1.msra.mxu0 0.0
    %415 = vmatprep.subr.mxu0 0.0
    %416 = vmatpush1.msra.mxu0 0.0
    %417 = vmatprep.subr.mxu0 0.0
    %418 = vmatpush1.msra.mxu0 0.0
    %419 = vmatprep.subr.mxu0 0.0
    %420 = vmatpush1.msra.mxu0 %v304
    %421 = vmatprep.subr.mxu0 0.0
    %422 = vmatpush1.msra.mxu0 %v303
    %423 = vmatprep.subr.mxu0 0.0
    %424 = vmatpush1.msra.mxu0 %v302
    %425 = vmatprep.subr.mxu0 0.0
    %426 = vmatpush1.msra.mxu0 %v301
    %427 = vmatprep.subr.mxu0 0.0
    %428 = vmatpush2.msra.mxu0 0.0
    %429 = vmatprep.subr.mxu0 0.0
    %430 = vmatpush2.msra.mxu0 0.0
    %431 = vmatprep.subr.mxu0 0.0
    %432 = vmatpush2.msra.mxu0 0.0
    %433 = vmatprep.subr.mxu0 0.0
    %434 = vmatpush2.msra.mxu0 0.0
    %435 = vmatprep.subr.mxu0 0.0
    %436 = vmatpush2.msra.mxu0 0.0
    %437 = vmatprep.subr.mxu0 0.0
    %438 = vmatpush2.msra.mxu0 0.0
    %439 = vmatprep.subr.mxu0 0.0
    %440 = vmatpush2.msra.mxu0 0.0
    %441 = vmatprep.subr.mxu0 0.0
    %442 = vmatpush2.msra.mxu0 0.0
    %443 = vmatprep.subr.mxu0 0.0
    %444 = vmatpush2.msra.mxu0 0.0
    %445 = vmatprep.subr.mxu0 0.0
    %446 = vmatpush2.msra.mxu0 0.0
    %447 = vmatprep.subr.mxu0 0.0
    %448 = vmatpush2.msra.mxu0 0.0
    %449 = vmatprep.subr.mxu0 0.0
    %450 = vmatpush2.msra.mxu0 0.0
    %451 = vmatprep.subr.mxu0 0.0
    %452 = vmatpush2.msra.mxu0 0.0
    %453 = vmatprep.subr.mxu0 0.0
    %454 = vmatpush2.msra.mxu0 0.0
    %455 = vmatprep.subr.mxu0 0.0
    %456 = vmatpush2.msra.mxu0 0.0
    %457 = vmatprep.subr.mxu0 0.0
    %458 = vmatpush2.msra.mxu0 0.0
    %459 = vmatprep.mubr.f32.mxu0 0.0
    %460 = vmatmul.mubr.f32.gmra.mxu0 %v112
    %v461 = vpop.f32.mrf.mxu0
    %v462 = vadd.f32 %v382, %v461
    %v463 = vpop.f32.mrf.mxu0
    %464 = vmatprep.mubr.f32.mxu0 0.0
    %465 = vmatmul.mubr.f32.gmra.mxu0 %v115
    %v466 = vpop.f32.mrf.mxu0
    %v467 = vadd.f32 %v387, %v466
    %v468 = vpop.f32.mrf.mxu0
    %469 = vmatprep.mubr.f32.mxu0 0.0
    %470 = vmatmul.mubr.f32.gmra.mxu0 %v118
    %v471 = vpop.f32.mrf.mxu0
    %v472 = vadd.f32 %v392, %v471
    %v473 = vpop.f32.mrf.mxu0
    %474 = vdwg.mxu0
    %v475 = vld [vmem:[%s7] sm:$0x1]
    %v477 = vlaneseq
    %v478 = vshrl.u32 %v477, 7
    %v479 = vsub.s32 0, %v478
    %v480 = vrot.slane %v475, %v479
    %v482 = vadd.f32 %v462, %v480
    %v483 = vadd.f32 %v467, %v480
    %v484 = vadd.f32 %v472, %v480
    %v485 = vmax.f32 %v482, 0.0
    %v486 = vmax.f32 %v483, 0.0
    %v487 = vmax.f32 %v484, 0.0
    %v488 = vld [vmem:[%s8] sm:$0xff]
    %v489 = vld [vmem:[%s8 + $0x8] sm:$0xff]
    %v490 = vld [vmem:[%s8 + $0x10] sm:$0xff]
    %v491 = vld [vmem:[%s8 + $0x18] sm:$0xff]
    %v492 = vld [vmem:[%s9] sm:$0x1]
    %v494 = vlaneseq
    %v495 = vshrl.u32 %v494, 7
    %v496 = vsub.s32 0, %v495
    %v497 = vrot.slane %v492, %v496
    %v500 = vsel %vm110, %v485, 0
    %v503 = vsel %vm110, %v486, 0
    %v506 = vsel %vm110, %v487, 0
    %508 = vmatprep.subr.mxu0 0.0
    %509 = vmatpush1.msra.mxu0 0.0
    %510 = vmatprep.subr.mxu0 0.0
    %511 = vmatpush1.msra.mxu0 0.0
    %512 = vmatprep.subr.mxu0 0.0
    %513 = vmatpush1.msra.mxu0 0.0
    %514 = vmatprep.subr.mxu0 0.0
    %515 = vmatpush1.msra.mxu0 0.0
    %516 = vmatprep.subr.mxu0 0.0
    %517 = vmatpush1.msra.mxu0 0.0
    %518 = vmatprep.subr.mxu0 0.0
    %519 = vmatpush1.msra.mxu0 0.0
    %520 = vmatprep.subr.mxu0 0.0
    %521 = vmatpush1.msra.mxu0 0.0
    %522 = vmatprep.subr.mxu0 0.0
    %523 = vmatpush1.msra.mxu0 0.0
    %524 = vmatprep.subr.mxu0 0.0
    %525 = vmatpush1.msra.mxu0 0.0
    %526 = vmatprep.subr.mxu0 0.0
    %527 = vmatpush1.msra.mxu0 0.0
    %528 = vmatprep.subr.mxu0 0.0
    %529 = vmatpush1.msra.mxu0 0.0
    %530 = vmatprep.subr.mxu0 0.0
    %531 = vmatpush1.msra.mxu0 0.0
    %532 = vmatprep.subr.mxu0 0.0
    %533 = vmatpush1.msra.mxu0 %v491
    %534 = vmatprep.subr.mxu0 0.0
    %535 = vmatpush1.msra.mxu0 %v490
    %536 = vmatprep.subr.mxu0 0.0
    %537 = vmatpush1.msra.mxu0 %v489
    %538 = vmatprep.subr.mxu0 0.0
    %539 = vmatpush1.msra.mxu0 %v488
    %540 = vmatprep.subr.mxu0 0.0
    %541 = vmatpush2.msra.mxu0 0.0
    %542 = vmatprep.subr.mxu0 0.0
    %543 = vmatpush2.msra.mxu0 0.0
    %544 = vmatprep.subr.mxu0 0.0
    %545 = vmatpush2.msra.mxu0 0.0
    %546 = vmatprep.subr.mxu0 0.0
    %547 = vmatpush2.msra.mxu0 0.0
    %548 = vmatprep.subr.mxu0 0.0
    %549 = vmatpush2.msra.mxu0 0.0
    %550 = vmatprep.subr.mxu0 0.0
    %551 = vmatpush2.msra.mxu0 0.0
    %552 = vmatprep.subr.mxu0 0.0
    %553 = vmatpush2.msra.mxu0 0.0
    %554 = vmatprep.subr.mxu0 0.0
    %555 = vmatpush2.msra.mxu0 0.0
    %556 = vmatprep.subr.mxu0 0.0
    %557 = vmatpush2.msra.mxu0 0.0
    %558 = vmatprep.subr.mxu0 0.0
    %559 = vmatpush2.msra.mxu0 0.0
    %560 = vmatprep.subr.mxu0 0.0
    %561 = vmatpush2.msra.mxu0 0.0
    %562 = vmatprep.subr.mxu0 0.0
    %563 = vmatpush2.msra.mxu0 0.0
    %564 = vmatprep.subr.mxu0 0.0
    %565 = vmatpush2.msra.mxu0 0.0
    %566 = vmatprep.subr.mxu0 0.0
    %567 = vmatpush2.msra.mxu0 0.0
    %568 = vmatprep.subr.mxu0 0.0
    %569 = vmatpush2.msra.mxu0 0.0
    %570 = vmatprep.subr.mxu0 0.0
    %571 = vmatpush2.msra.mxu0 0.0
    %572 = vmatprep.mubr.f32.mxu0 0.0
    %573 = vmatmul.mubr.f32.gmra.mxu0 %v500
    %v574 = vpop.f32.mrf.mxu0
    %v575 = vadd.f32 %v497, %v574
    %v576 = vpop.f32.mrf.mxu0
    %577 = vmatprep.mubr.f32.mxu0 0.0
    %578 = vmatmul.mubr.f32.gmra.mxu0 %v503
    %v579 = vpop.f32.mrf.mxu0
    %v580 = vadd.f32 %v497, %v579
    %v581 = vpop.f32.mrf.mxu0
    %582 = vmatprep.mubr.f32.mxu0 0.0
    %583 = vmatmul.mubr.f32.gmra.mxu0 %v506
    %v584 = vpop.f32.mrf.mxu0
    %v585 = vadd.f32 %v497, %v584
    %v586 = vpop.f32.mrf.mxu0
    %587 = vdwg.mxu0
    %v588 = vmax.f32 %v575, 0.0
    %v589 = vmax.f32 %v580, 0.0
    %v590 = vmax.f32 %v585, 0.0
    %v591 = vld [vmem:[%s10] sm:$0xff]
    %v592 = vld [vmem:[%s10 + $0x8] sm:$0xff]
    %v593 = vld [vmem:[%s10 + $0x10] sm:$0xff]
    %v594 = vld [vmem:[%s10 + $0x18] sm:$0xff]
    %v595 = vld [vmem:[%s11] sm:$0x1]
    %v597 = vlaneseq
    %v598 = vshrl.u32 %v597, 7
    %v599 = vsub.s32 0, %v598
    %v600 = vrot.slane %v595, %v599
    %v603 = vsel %vm110, %v588, 0
    %v606 = vsel %vm110, %v589, 0
    %v609 = vsel %vm110, %v590, 0
    %611 = vmatprep.subr.mxu0 0.0
    %612 = vmatpush1.msra.mxu0 0.0
    %613 = vmatprep.subr.mxu0 0.0
    %614 = vmatpush1.msra.mxu0 0.0
    %615 = vmatprep.subr.mxu0 0.0
    %616 = vmatpush1.msra.mxu0 0.0
    %617 = vmatprep.subr.mxu0 0.0
    %618 = vmatpush1.msra.mxu0 0.0
    %619 = vmatprep.subr.mxu0 0.0
    %620 = vmatpush1.msra.mxu0 0.0
    %621 = vmatprep.subr.mxu0 0.0
    %622 = vmatpush1.msra.mxu0 0.0
    %623 = vmatprep.subr.mxu0 0.0
    %624 = vmatpush1.msra.mxu0 0.0
    %625 = vmatprep.subr.mxu0 0.0
    %626 = vmatpush1.msra.mxu0 0.0
    %627 = vmatprep.subr.mxu0 0.0
    %628 = vmatpush1.msra.mxu0 0.0
    %629 = vmatprep.subr.mxu0 0.0
    %630 = vmatpush1.msra.mxu0 0.0
    %631 = vmatprep.subr.mxu0 0.0
    %632 = vmatpush1.msra.mxu0 0.0
    %633 = vmatprep.subr.mxu0 0.0
    %634 = vmatpush1.msra.mxu0 0.0
    %635 = vmatprep.subr.mxu0 0.0
    %636 = vmatpush1.msra.mxu0 %v594
    %637 = vmatprep.subr.mxu0 0.0
    %638 = vmatpush1.msra.mxu0 %v593
    %639 = vmatprep.subr.mxu0 0.0
    %640 = vmatpush1.msra.mxu0 %v592
    %641 = vmatprep.subr.mxu0 0.0
    %642 = vmatpush1.msra.mxu0 %v591
    %643 = vmatprep.subr.mxu0 0.0
    %644 = vmatpush2.msra.mxu0 0.0
    %645 = vmatprep.subr.mxu0 0.0
    %646 = vmatpush2.msra.mxu0 0.0
    %647 = vmatprep.subr.mxu0 0.0
    %648 = vmatpush2.msra.mxu0 0.0
    %649 = vmatprep.subr.mxu0 0.0
    %650 = vmatpush2.msra.mxu0 0.0
    %651 = vmatprep.subr.mxu0 0.0
    %652 = vmatpush2.msra.mxu0 0.0
    %653 = vmatprep.subr.mxu0 0.0
    %654 = vmatpush2.msra.mxu0 0.0
    %655 = vmatprep.subr.mxu0 0.0
    %656 = vmatpush2.msra.mxu0 0.0
    %657 = vmatprep.subr.mxu0 0.0
    %658 = vmatpush2.msra.mxu0 0.0
    %659 = vmatprep.subr.mxu0 0.0
    %660 = vmatpush2.msra.mxu0 0.0
    %661 = vmatprep.subr.mxu0 0.0
    %662 = vmatpush2.msra.mxu0 0.0
    %663 = vmatprep.subr.mxu0 0.0
    %664 = vmatpush2.msra.mxu0 0.0
    %665 = vmatprep.subr.mxu0 0.0
    %666 = vmatpush2.msra.mxu0 0.0
    %667 = vmatprep.subr.mxu0 0.0
    %668 = vmatpush2.msra.mxu0 0.0
    %669 = vmatprep.subr.mxu0 0.0
    %670 = vmatpush2.msra.mxu0 0.0
    %671 = vmatprep.subr.mxu0 0.0
    %672 = vmatpush2.msra.mxu0 0.0
    %673 = vmatprep.subr.mxu0 0.0
    %674 = vmatpush2.msra.mxu0 0.0
    %675 = vmatprep.mubr.f32.mxu0 0.0
    %676 = vmatmul.mubr.f32.gmra.mxu0 %v603
    %v677 = vpop.f32.mrf.mxu0
    %v678 = vadd.f32 %v600, %v677
    %v679 = vpop.f32.mrf.mxu0
    %680 = vmatprep.mubr.f32.mxu0 0.0
    %681 = vmatmul.mubr.f32.gmra.mxu0 %v606
    %v682 = vpop.f32.mrf.mxu0
    %v683 = vadd.f32 %v600, %v682
    %v684 = vpop.f32.mrf.mxu0
    %685 = vmatprep.mubr.f32.mxu0 0.0
    %686 = vmatmul.mubr.f32.gmra.mxu0 %v609
    %v687 = vpop.f32.mrf.mxu0
    %v688 = vadd.f32 %v600, %v687
    %v689 = vpop.f32.mrf.mxu0
    %690 = vdwg.mxu0
    %v691 = vmax.f32 %v678, 0.0
    %v692 = vmax.f32 %v683, 0.0
    %v693 = vmax.f32 %v688, 0.0
    %v694 = vld [vmem:[%s12] sm:$0xff]
    %v695 = vld [vmem:[%s12 + $0x8] sm:$0xff]
    %v696 = vld [vmem:[%s12 + $0x10] sm:$0xff]
    %v697 = vld [vmem:[%s12 + $0x18] sm:$0xff]
    %v698 = vld [vmem:[%s13] sm:$0x1]
    %v700 = vlaneseq
    %v701 = vshrl.u32 %v700, 7
    %v702 = vsub.s32 0, %v701
    %v703 = vrot.slane %v698, %v702
    %v706 = vsel %vm110, %v691, 0
    %v709 = vsel %vm110, %v692, 0
    %v712 = vsel %vm110, %v693, 0
    %714 = vmatprep.subr.mxu0 0.0
    %715 = vmatpush1.msra.mxu0 0.0
    %716 = vmatprep.subr.mxu0 0.0
    %717 = vmatpush1.msra.mxu0 0.0
    %718 = vmatprep.subr.mxu0 0.0
    %719 = vmatpush1.msra.mxu0 0.0
    %720 = vmatprep.subr.mxu0 0.0
    %721 = vmatpush1.msra.mxu0 0.0
    %722 = vmatprep.subr.mxu0 0.0
    %723 = vmatpush1.msra.mxu0 0.0
    %724 = vmatprep.subr.mxu0 0.0
    %725 = vmatpush1.msra.mxu0 0.0
    %726 = vmatprep.subr.mxu0 0.0
    %727 = vmatpush1.msra.mxu0 0.0
    %728 = vmatprep.subr.mxu0 0.0
    %729 = vmatpush1.msra.mxu0 0.0
    %730 = vmatprep.subr.mxu0 0.0
    %731 = vmatpush1.msra.mxu0 0.0
    %732 = vmatprep.subr.mxu0 0.0
    %733 = vmatpush1.msra.mxu0 0.0
    %734 = vmatprep.subr.mxu0 0.0
    %735 = vmatpush1.msra.mxu0 0.0
    %736 = vmatprep.subr.mxu0 0.0
    %737 = vmatpush1.msra.mxu0 0.0
    %738 = vmatprep.subr.mxu0 0.0
    %739 = vmatpush1.msra.mxu0 %v697
    %740 = vmatprep.subr.mxu0 0.0
    %741 = vmatpush1.msra.mxu0 %v696
    %742 = vmatprep.subr.mxu0 0.0
    %743 = vmatpush1.msra.mxu0 %v695
    %744 = vmatprep.subr.mxu0 0.0
    %745 = vmatpush1.msra.mxu0 %v694
    %746 = vmatprep.subr.mxu0 0.0
    %747 = vmatpush2.msra.mxu0 0.0
    %748 = vmatprep.subr.mxu0 0.0
    %749 = vmatpush2.msra.mxu0 0.0
    %750 = vmatprep.subr.mxu0 0.0
    %751 = vmatpush2.msra.mxu0 0.0
    %752 = vmatprep.subr.mxu0 0.0
    %753 = vmatpush2.msra.mxu0 0.0
    %754 = vmatprep.subr.mxu0 0.0
    %755 = vmatpush2.msra.mxu0 0.0
    %756 = vmatprep.subr.mxu0 0.0
    %757 = vmatpush2.msra.mxu0 0.0
    %758 = vmatprep.subr.mxu0 0.0
    %759 = vmatpush2.msra.mxu0 0.0
    %760 = vmatprep.subr.mxu0 0.0
    %761 = vmatpush2.msra.mxu0 0.0
    %762 = vmatprep.subr.mxu0 0.0
    %763 = vmatpush2.msra.mxu0 0.0
    %764 = vmatprep.subr.mxu0 0.0
    %765 = vmatpush2.msra.mxu0 0.0
    %766 = vmatprep.subr.mxu0 0.0
    %767 = vmatpush2.msra.mxu0 0.0
    %768 = vmatprep.subr.mxu0 0.0
    %769 = vmatpush2.msra.mxu0 0.0
    %770 = vmatprep.subr.mxu0 0.0
    %771 = vmatpush2.msra.mxu0 0.0
    %772 = vmatprep.subr.mxu0 0.0
    %773 = vmatpush2.msra.mxu0 0.0
    %774 = vmatprep.subr.mxu0 0.0
    %775 = vmatpush2.msra.mxu0 0.0
    %776 = vmatprep.subr.mxu0 0.0
    %777 = vmatpush2.msra.mxu0 0.0
    %778 = vmatprep.mubr.f32.mxu0 0.0
    %779 = vmatmul.mubr.f32.gmra.mxu0 %v706
    %v780 = vpop.f32.mrf.mxu0
    %v781 = vadd.f32 %v703, %v780
    %v782 = vpop.f32.mrf.mxu0
    %783 = vmatprep.mubr.f32.mxu0 0.0
    %784 = vmatmul.mubr.f32.gmra.mxu0 %v709
    %v785 = vpop.f32.mrf.mxu0
    %v786 = vadd.f32 %v703, %v785
    %v787 = vpop.f32.mrf.mxu0
    %788 = vmatprep.mubr.f32.mxu0 0.0
    %789 = vmatmul.mubr.f32.gmra.mxu0 %v712
    %v790 = vpop.f32.mrf.mxu0
    %v791 = vadd.f32 %v703, %v790
    %v792 = vpop.f32.mrf.mxu0
    %793 = vdwg.mxu0
    %vm794 = vcmask 80896
    %795 = vst.msk [vmem:[%s14] sm:$0xff] %vm794, %v781
    %796 = vst.msk [vmem:[%s14 + $0x8] sm:$0xff] %vm794, %v786
    %797 = vst.msk [vmem:[%s14 + $0x10] sm:$0xff] %vm794, %v791
    // Predicated region
    $region74: #{dqn_forward.1} parent=1 // pred_check
      _
    $region75: #{dqn_forward.1} parent=1 // pred_check_branch
      %799 = sbr.rel (0) target = $region77
    $region76: #{dqn_forward.1} parent=1 // pred_region
      _
    $region77: #{dqn_forward.1} parent=1 // pred_fallthru
      _
    // Predicated region
    $region78: #{dqn_forward.1} parent=1 // pred_check
      _
    $region79: #{dqn_forward.1} parent=1 // pred_check_branch
      %801 = sbr.rel (0) target = $region81
    $region80: #{dqn_forward.1} parent=1 // pred_region
      _
    $region81: #{dqn_forward.1} parent=1 // pred_fallthru
      _
    %802 = vsyncpa [#allocation3], 1
    %803 = vsyncpa [#allocation5], 1
    %804 = vsyncpa [#allocation8], 1

</llo_original>
